<compile_context>
chip_gen: v5e
topology: v5e:2x2
jax: 0.10.0
libtpu: 0.0.40
codegen_flags: <defaults>
</compile_context>

<pallas_src>
import functools

import jax
import jax.numpy as jnp
from jax.experimental import pallas as pl
from jax.experimental.pallas import tpu as pltpu

_EPS = 1e-8  # matches torch.nn.functional.cosine_similarity default eps


# ---------------------------------------------------------------------------
# Kernel
# ---------------------------------------------------------------------------

def _make_similar_to_kernel(rc: int, n_full: int, rem: int):
    """Kernel for one (tb, C) x tile, processed in row chunks of `rc` rows.

    rc, n_full, rem are static Python ints (tb = n_full * rc + rem).
    """

    def kernel(x_ref, v_ref, o_ref):
        vf = v_ref[...]  # (1, C) f32 target direction, loaded once per tile

        def process(r0, rows):
            # `rows` is static; `r0` may be dynamic. Everything is f32 on the VPU;
            # the cross-lane reduce goes to the XLU and rsqrt to the EUP.
            xc = x_ref[pl.ds(r0, rows), :].astype(jnp.float32)        # (rows, C)
            dot = jnp.sum(xc * vf, axis=-1, keepdims=True)            # (rows, 1)
            ssx = jnp.sum(xc * xc, axis=-1, keepdims=True)            # (rows, 1)
            inv = jax.lax.rsqrt(jnp.maximum(ssx, _EPS * _EPS))        # 1 / max(||x||, eps)
            o_ref[pl.ds(r0, rows), :] = (dot * inv).astype(o_ref.dtype)

        if n_full == 1 and rem == 0:
            process(0, rc)                       # single chunk: fully static path
        else:
            if n_full > 0:
                def body(c, carry):
                    r0 = c * rc
                    if rc % 8 == 0:
                        r0 = pl.multiple_of(r0, 8)
                    process(r0, rc)
                    return carry
                jax.lax.fori_loop(0, n_full, body, 0)
            if rem > 0:
                process(n_full * rc, rem)        # static tail chunk

    return kernel


# ---------------------------------------------------------------------------
# Tiling / VMEM configuration
# ---------------------------------------------------------------------------

def _round_up(n: int, m: int) -> int:
    return ((n + m - 1) // m) * m


def _vmem_config():
    """(per-tile x byte budget, vmem_limit_bytes), chosen per TPU generation."""
    kind = ""
    try:
        kind = jax.devices()[0].device_kind.lower()
    except Exception:
        pass
    if "v6" in kind:            # v6e: 128 MiB physical VMEM, ~1.4 TB/s HBM
        return 16 << 20, 64 << 20
    if "v5" in kind:            # v5e: keep tiles modest, raise the 16 MiB scoped default
        return 8 << 20, 40 << 20
    if "7" in kind:             # v7x: only 64 MiB VMEM per TC -> leave headroom
        return 14 << 20, 48 << 20
    return 8 << 20, 40 << 20    # conservative default, fits every generation


def _choose_batch_tile(B: int, C: int, itemsize: int, budget_bytes: int) -> int:
    """Largest batch tile under the VMEM budget; ensures >= 2 grid programs when B > 8
    so the 'parallel' batch axis can shard across v7x's two TensorCores."""
    if B <= 8:
        return B                                   # single full-extent block
    row_bytes = max(C * itemsize, 1)
    tb = budget_bytes // row_bytes
    half = _round_up(pl.cdiv(B, 2), 8)             # guarantees at least 2 programs
    tb = min(tb, half, 16384)
    tb = max((tb // 8) * 8, 8)
    return min(tb, B)


def _choose_row_chunk(tb: int, C: int, max_chunk_rows=None) -> int:
    """Row chunk bounding the in-kernel f32 intermediates to ~1 MiB per chunk."""
    rc = (1 << 20) // max(C * 4, 1)
    rc = min(rc, 1024)
    if max_chunk_rows is not None:
        rc = min(rc, max(int(max_chunk_rows), 1))
    if rc >= tb:
        return tb
    return max((rc // 8) * 8, 8)


# ---------------------------------------------------------------------------
# Wrappers
# ---------------------------------------------------------------------------

def _similar_to_impl(x: jax.Array, v: jax.Array, *, max_chunk_rows=None) -> jax.Array:
    """x: (B, C), v: (1, C) f32 pre-reduced target direction -> (B,) f32."""
    B, C = x.shape
    assert v.shape == (1, C), "channel mismatch"
    itemsize = jnp.dtype(x.dtype).itemsize

    budget, vmem_limit = _vmem_config()
    tb = _choose_batch_tile(B, C, itemsize, budget)
    rc = _choose_row_chunk(tb, C, max_chunk_rows)
    n_full, rem = divmod(tb, rc)

    kernel = _make_similar_to_kernel(rc, n_full, rem)

    out = pl.pallas_call(
        kernel,
        out_shape=jax.ShapeDtypeStruct((B, 1), jnp.float32),
        grid=(pl.cdiv(B, tb),),                       # ragged last block, no padding
        in_specs=[
            pl.BlockSpec((tb, C), lambda i: (i, 0)),  # x tile, pipelined over batch
            pl.BlockSpec((1, C), lambda i: (0, 0)),   # v stays resident in VMEM
        ],
        out_specs=pl.BlockSpec((tb, 1), lambda i: (i, 0)),
        compiler_params=pltpu.CompilerParams(
            dimension_semantics=("parallel",),        # shard batch across TCs on v7x
            vmem_limit_bytes=vmem_limit,
        ),
        cost_estimate=pl.CostEstimate(
            flops=4 * B * C,
            transcendentals=B,
            bytes_accessed=B * C * itemsize + C * 4 + B * 4,
        ),
    )(x, v.astype(jnp.float32))

    return out[:, 0]


def _prepare_target_direction(targets: jax.Array) -> jax.Array:
    """One-time preprocessing of the fixed `targets` parameter -> (1, C) f32."""
    t32 = targets.astype(jnp.float32)
    nrm = jnp.sqrt(jnp.sum(t32 * t32, axis=-1, keepdims=True))
    t_hat = t32 / jnp.maximum(nrm, _EPS)          # per-target unit vectors
    return jnp.mean(t_hat, axis=0, keepdims=True)


def make_similar_to(targets: jax.Array):
    """Module-style factory: pre-reduces the fixed targets once, returns fwd(x)->(B,)."""
    v = _prepare_target_direction(targets)
    return jax.jit(functools.partial(_similar_to_impl, v=v))


def similar_to(x: jax.Array, targets: jax.Array, *, max_chunk_rows=None) -> jax.Array:
    """One-shot API: x (B, C), targets (T, C) -> (B,) f32.

    Matches torch cosine_similarity + mean over targets except for near-zero-norm
    inputs/targets (eps clamp is applied per vector rather than on the norm product).
    """
    return _similar_to_impl(x, _prepare_target_direction(targets),
                            max_chunk_rows=max_chunk_rows)


# ---------------------------------------------------------------------------
# Reference + self-test
# ---------------------------------------------------------------------------

def _reference(x, targets, eps=_EPS):
    """Pure-JAX oracle with torch.cosine_similarity semantics (clamp on the norm product)."""
    xf = x.astype(jnp.float32)
    tf = targets.astype(jnp.float32)
    xn = jnp.sqrt(jnp.sum(xf * xf, axis=-1, keepdims=True))   # (B, 1)
    tn = jnp.sqrt(jnp.sum(tf * tf, axis=-1, keepdims=True))   # (T, 1)
    sim = jnp.matmul(xf, tf.T, precision=jax.lax.Precision.HIGHEST)
    sim = sim / jnp.maximum(xn * tn.T, eps)
    return sim.mean(axis=1)


if __name__ == "__main__":
    key = jax.random.PRNGKey(0)
    kx, kt, kx2, kt2, kx3, kt3 = jax.random.split(key, 6)

    # Case 1: module-style usage (targets pre-reduced once at build time), tiny shapes.
    batch, channels, n_targets = 2, 32, 4
    x = jax.random.normal(kx, (batch, channels), dtype=jnp.float32)
    targets = jax.random.normal(kt, (n_targets, channels), dtype=jnp.float32)
    fwd = make_similar_to(targets)
    out = jax.block_until_ready(fwd(x))
    ref = _reference(x, targets)
    assert out.shape == (batch,)
    assert jnp.allclose(out, ref, atol=1e-5, rtol=1e-5), (out, ref)

    # Case 2: B not a multiple of the batch tile -> ragged last grid block (no padding),
    # and >= 2 grid programs.
    x2 = jax.random.normal(kx2, (20, 128), dtype=jnp.float32)
    t2 = jax.random.normal(kt2, (5, 128), dtype=jnp.float32)
    out2 = jax.block_until_ready(similar_to(x2, t2))
    ref2 = _reference(x2, t2)
    assert out2.shape == (20,)
    assert jnp.allclose(out2, ref2, atol=1e-5, rtol=1e-5), (out2, ref2)

    # Case 3: bf16 input + forced small row chunks to exercise the in-kernel fori_loop
    # and static tail-chunk path (the path large production tiles take).
    x3 = jax.random.normal(kx3, (44, 128), dtype=jnp.bfloat16)
    t3 = jax.random.normal(kt3, (3, 128), dtype=jnp.float32)
    out3 = jax.block_until_ready(similar_to(x3, t3, max_chunk_rows=16))
    ref3 = _reference(x3, t3)
    assert out3.shape == (44,)
    assert jnp.allclose(out3, ref3, atol=1e-4, rtol=1e-3), (out3, ref3)

    print("KERNEL_OK")
</pallas_src>

<mosaic_0001>
module attributes {stable_mosaic.version = 11 : i64} {
  func.func @kernel(%arg0: i32, %arg1: memref<2x32xf32, #tpu.memory_space<vmem>>, %arg2: memref<1x32xf32, #tpu.memory_space<vmem>>, %arg3: memref<2x1xf32, #tpu.memory_space<vmem>>) attributes {dimension_semantics = [#tpu.dimension_semantics<parallel>], iteration_bounds = array<i64: 1>, scalar_prefetch = 0 : i64, scratch_operands = 0 : i64, tpu.core_type = #tpu.core_type<tc>, window_params = [{transform_indices = @transform_0, window_bounds = array<i64: 2, 32>}, {pipeline_mode = #tpu.pipeline_mode<synchronous>, transform_indices = @transform_1, window_bounds = array<i64: 1, 32>}, {transform_indices = @transform_2, window_bounds = array<i64: 2, 1>}]} {
    %c0 = arith.constant 0 : index
    %c0_0 = arith.constant 0 : index
    %0 = vector.load %arg2[%c0, %c0_0] : memref<1x32xf32, #tpu.memory_space<vmem>>, vector<1x32xf32>
    %c0_1 = arith.constant 0 : index
    %c0_2 = arith.constant 0 : index
    %1 = vector.load %arg1[%c0_1, %c0_2] : memref<2x32xf32, #tpu.memory_space<vmem>>, vector<2x32xf32>
    %2 = vector.broadcast %0 : vector<1x32xf32> to vector<2x32xf32>
    %3 = arith.mulf %1, %2 : vector<2x32xf32>
    %cst = arith.constant dense<0.000000e+00> : vector<2xf32>
    %4 = vector.multi_reduction <add>, %3, %cst [1] : vector<2x32xf32> to vector<2xf32>
    %5 = vector.shape_cast %4 : vector<2xf32> to vector<2x1xf32>
    %6 = arith.mulf %1, %1 : vector<2x32xf32>
    %cst_3 = arith.constant dense<0.000000e+00> : vector<2xf32>
    %7 = vector.multi_reduction <add>, %6, %cst_3 [1] : vector<2x32xf32> to vector<2xf32>
    %8 = vector.shape_cast %7 : vector<2xf32> to vector<2x1xf32>
    %cst_4 = arith.constant 1.000000e-16 : f32
    %9 = vector.broadcast %cst_4 : f32 to vector<2x1xf32>
    %10 = arith.maximumf %8, %9 : vector<2x1xf32>
    %11 = math.rsqrt %10 : vector<2x1xf32>
    %12 = arith.mulf %5, %11 : vector<2x1xf32>
    %c0_5 = arith.constant 0 : index
    %c0_6 = arith.constant 0 : index
    %13 = vector.load %arg3[%c0_5, %c0_6] : memref<2x1xf32, #tpu.memory_space<vmem>>, vector<2x1xf32>
    tpu.vector_store %arg3[%c0_5, %c0_6], %12 {strides = array<i32>} : memref<2x1xf32, #tpu.memory_space<vmem>>, vector<2x1xf32>,
    return
  }
  func.func @transform_0(%arg0: i32) -> (i32, i32) {
    %c0_i32 = arith.constant 0 : i32
    %c0_i32_0 = arith.constant 0 : i32
    return %arg0, %c0_i32 : i32, i32
  }
  func.func @transform_1(%arg0: i32) -> (i32, i32) {
    %c0_i32 = arith.constant 0 : i32
    %c0_i32_0 = arith.constant 0 : i32
    %c0_i32_1 = arith.constant 0 : i32
    return %c0_i32, %c0_i32_0 : i32, i32
  }
  func.func @transform_2(%arg0: i32) -> (i32, i32) {
    %c0_i32 = arith.constant 0 : i32
    %c0_i32_0 = arith.constant 0 : i32
    return %arg0, %c0_i32 : i32, i32
  }
}

</mosaic_0001>

<llo_original>
// kernel: _similar_to_impl.1
$region0: #{_similar_to_impl.1}
  #allocation0 [shape = 'u32[]', space=smem, size = 0x4, offset = 0x4, fixed_abs, tag = 'smem constant byte address 0x4 - core index']
  #allocation1 [shape = 'u32[72,128]{1,0:T(1,128)}', space=vmem, size = 0x9000, scoped, tag = 'internal scratch']
  %s0 = inlined_call_operand.hbm [shape: f32[2,32], index: 0, kind: input, shape index: {}]
  %s1 = inlined_call_operand.vmem [shape: f32[1,32], index: 1, kind: input, shape index: {}]
  %s2 = inlined_call_operand.vmem [shape: f32[2,1], index: 2, kind: output, shape index: {}]
  %s3 = sld [smem:[#allocation0]]
  $region22: #{_similar_to_impl.1} parent=0
    _
  %s5 = ssub.s32 1, %s3
  %s6 = scalar_select 0, %s5, %s3
  $region1: #{_similar_to_impl.1} parent=0
    #allocation2 [shape = 'u8[1024]{0}', space=vmem, size = 0x400, scoped, tag = 'input window, operand 0, single buffered']
    #allocation3 [shape = 's32[1]{0}', space=sflag, size = 0x4, scoped, tag = 'scoped memory for _similar_to_impl.1']
    %7 = vsyncpa [#allocation3], 0
    // Predicated region
    $region2: #{_similar_to_impl.1} parent=1 // pred_check
      _
    $region3: #{_similar_to_impl.1} parent=1 // pred_check_branch
      %9 = sbr.rel (0) target = $region5
    $region4: #{_similar_to_impl.1} parent=1 // pred_region
      %11 = vsyncadd [#allocation3], 0
      %s13 = sshll.u32 %s0, 4
      %s14 = int_to_ptr.hbm [resolvable:$true] %s13
      %s15 = sshll.u32 [#allocation2], 4
      %s16 = int_to_ptr.vmem [resolvable:$true] %s15
      %18 = dma.hbm_to_vmem [thread:$0]  %s14, 32, %s16, [#allocation3]
    $region5: #{_similar_to_impl.1} parent=1 // pred_fallthru
      _
    // Predicated region
    $region6: #{_similar_to_impl.1} parent=1 // pred_check
      _
    $region7: #{_similar_to_impl.1} parent=1 // pred_check_branch
      %20 = sbr.rel (0) target = $region9
    $region8: #{_similar_to_impl.1} parent=1 // pred_region
      _
    $region9: #{_similar_to_impl.1} parent=1 // pred_fallthru
      _
    // Predicated region
    $region10: #{_similar_to_impl.1} parent=1 // pred_check
      _
    $region11: #{_similar_to_impl.1} parent=1 // pred_check_branch
      %22 = sbr.rel (0) target = $region13
    $region12: #{_similar_to_impl.1} parent=1 // pred_region
      %24 = dma.done [#allocation3], 32
    $region13: #{_similar_to_impl.1} parent=1 // pred_fallthru
      _
    %v25 = vld [vmem:[%s1] sm:$0x1]
    %v26 = vld [vmem:[#allocation2] sm:$0x3]
    %v28 = vperm.slane %v25, 0
    %v30 = vmul.f32 %v26, %v28
    %vm31 = vcmask 254976
    %v32 = vsel %vm31, %v30, 0.0
    %33 = vadd.xlane.f32.xlu0 %v32
    %v34 = vpop.xlane.xlu0 %33
    %v35 = vmul.f32 %v26, %v26
    %v36 = vsel %vm31, %v35, 0.0
    %37 = vadd.xlane.f32.xlu0 %v36
    %v38 = vpop.xlane.xlu0 %37
    %v39 = vmax.f32 %v38, 1e-16
    %v40 = vrsqrt.pop %v39
    %v41 = vmul.f32 %v40, %v39
    %v42 = vmul.f32 %v41, %v40
    %v43 = vmul.f32 0.5, %v42
    %v44 = vsub.f32 1.5, %v43
    %v45 = vmul.f32 %v40, %v44
    %vm46 = vweird.f32 %v39
    %vm47 = vweird.f32 %v40
    %vm48 = vmor %vm46, %vm47
    %v49 = vsel %vm48, %v40, %v45
    %v50 = vmul.f32 %v34, %v49
    %vm51 = vcmask 1024
    %52 = vst.msk [vmem:[%s2] sm:$0x3] %vm51, %v50
    // Predicated region
    $region14: #{_similar_to_impl.1} parent=1 // pred_check
      _
    $region15: #{_similar_to_impl.1} parent=1 // pred_check_branch
      %54 = sbr.rel (0) target = $region17
    $region16: #{_similar_to_impl.1} parent=1 // pred_region
      _
    $region17: #{_similar_to_impl.1} parent=1 // pred_fallthru
      _
    // Predicated region
    $region18: #{_similar_to_impl.1} parent=1 // pred_check
      _
    $region19: #{_similar_to_impl.1} parent=1 // pred_check_branch
      %56 = sbr.rel (0) target = $region21
    $region20: #{_similar_to_impl.1} parent=1 // pred_region
      _
    $region21: #{_similar_to_impl.1} parent=1 // pred_fallthru
      _
    %57 = vsyncpa [#allocation3], 1

</llo_original>
